<compile_context>
chip_gen: v7x
topology: tpu7x:2x2x1
jax: 0.10.0
libtpu: 0.0.40
codegen_flags: <defaults>
</compile_context>

<pallas_src>
import jax
import jax.numpy as jnp
import numpy as np
from jax.experimental import pallas as pl
from jax.experimental.pallas import tpu as pltpu


def attention_kernel(si_ref, hj_ref, wt_ref, vt_ref, fcw_ref, b_ref, fcb_ref,
                     out_ref):
    """One batch block.

    si_ref : (Bb, Dd)      hj_ref : (Bb, T, De)
    wt_ref : (Dd, A)       vt_ref : (De, A)
    fcw_ref: (1, A)        b_ref  : (1, A)       fcb_ref: (1, 1) in SMEM
    out_ref: (Bb, Wp) -- [ context | attn | zero pad ] packed along lanes
    """
    f32 = jnp.float32
    si = si_ref[...].astype(f32)                  # (Bb, Dd)  (no-op for f32 input)
    hj = hj_ref[...].astype(f32)                  # (Bb, T, De)
    Bb, T, De = hj.shape

    # Decoder projection: one (Bb, Dd) x (Dd, A) MXU matmul per block.
    s_proj = jnp.dot(si, wt_ref[...].astype(f32),
                     preferred_element_type=f32)                       # (Bb, A)

    # Encoder projection: contract the last dim of hj directly (no in-kernel
    # reshape -> no VMEM relayout copy); still a single MXU matmul.
    h_proj = jax.lax.dot_general(
        hj, vt_ref[...].astype(f32),
        dimension_numbers=(((2,), (0,)), ((), ())),
        preferred_element_type=f32)                                    # (Bb, T, A)

    z = jnp.tanh(s_proj[:, None, :] + h_proj + b_ref[...].astype(f32))  # (Bb, T, A)

    # fc score: VPU multiply + lane reduce over A (keeps the MXU free),
    # scalar fc bias read from SMEM.
    e = jnp.sum(z * fcw_ref[...].astype(f32), axis=-1) + fcb_ref[0, 0]   # (Bb, T)

    # Softmax over the T (lane) axis.
    m = jnp.max(e, axis=-1, keepdims=True)
    p = jnp.exp(e - m)
    denom = jnp.sum(p, axis=-1, keepdims=True)
    # NOTE: approx=True would push this reciprocal onto the EUP slot, but its
    # reduced precision would break the 1e-5 check against the f32 reference,
    # so the exact reciprocal is kept here.
    attn = p * pl.reciprocal(denom, approx=False)                        # (Bb, T)

    # Context: broadcast multiply + sublane (T) reduce — cheaper than an
    # MXU matmul with K = T = 8.
    ctx = jnp.sum(attn[:, :, None] * hj, axis=1)                         # (Bb, De)

    # Single lane-dense store: pack [ctx | attn | zeros] into the (Bb, Wp)
    # output slab (Wp is a multiple of 128) so the store is a full-width
    # unmasked vst instead of two narrow masked vst.msk stores.
    Wp = out_ref.shape[-1]
    pad = Wp - (De + T)
    pieces = [ctx.astype(out_ref.dtype), attn.astype(out_ref.dtype)]
    if pad:
        pieces.append(jnp.zeros((Bb, pad), out_ref.dtype))
    out_ref[...] = jnp.concatenate(pieces, axis=-1)


def _choose_batch_block(B, T, De, *, cap=1024, hj_budget_bytes=8 << 20):
    """Pick (Bb, B_eff): Bb a multiple of 8 that divides B_eff.

    Bb is bounded so the double-buffered Hj tile stays within hj_budget_bytes
    (re-derived per shape, so v7x's smaller VMEM is respected at scaled T/De).
    Prefers Bb dividing B exactly (no Hj padding copy) and grid length >= 2
    (v7x megacore).  Falls back to padding the batch to a multiple of 8 only
    when B has no suitable divisor (e.g. tiny test batches).
    """
    row_bytes = max(1, T * De * 4)
    fit = min(cap, hj_budget_bytes // (2 * row_bytes))
    fit = max(8, (fit // 8) * 8)

    def best_divisor(n):
        cands = [bb for bb in range(8, min(fit, n) + 1, 8) if n % bb == 0]
        if not cands:
            return None
        multi = [bb for bb in cands if n // bb >= 2]   # keep grid >= 2 if possible
        return max(multi) if multi else max(cands)

    bb = best_divisor(B)
    if bb is not None:
        return bb, B                       # Hj streams un-copied
    b_pad = -(-B // 8) * 8
    return (best_divisor(b_pad) or 8), b_pad


def attention_forward(si, hj, w, v, fc_w, fc_b, b, *, batch_block=None):
    """si:(B,1,Dd), hj:(B,T,De), w:(A,Dd), v:(A,De), fc_w:(1,A), fc_b:(1,), b:(A,)."""
    B, _, Dd = si.shape
    _, T, De = hj.shape
    A = w.shape[0]

    if batch_block is None:
        Bb, B_eff = _choose_batch_block(B, T, De)
    else:
        Bb = max(8, (int(batch_block) // 8) * 8)
        B_eff = -(-B // Bb) * Bb

    si2d = si.reshape(B, Dd)
    hj_in = hj
    if B_eff != B:
        # Fallback for batches with no multiple-of-8 divisor (tiny test case).
        # For realistic batch sizes _choose_batch_block picks Bb dividing B,
        # so the large Hj tensor is never copied here.
        si2d = jnp.pad(si2d, ((0, B_eff - B), (0, 0)))
        hj_in = jnp.pad(hj, ((0, B_eff - B), (0, 0), (0, 0)))

    wt = w.T                      # (Dd, A)
    vt = v.T                      # (De, A)
    fcw_row = fc_w.reshape(1, A)  # (1, A)
    b2 = b.reshape(1, A)          # (1, A)
    fcb2 = fc_b.reshape(1, 1)     # scalar in SMEM

    # Packed, lane-dense output width (multiple of 128 lanes).
    Wp = ((De + T + 127) // 128) * 128

    # Explicit scoped-VMEM limit: double-buffered blocks + live temporaries,
    # with headroom; clamped to [16 MiB, 32 MiB] so it is valid on every chip
    # generation (v5e default scope is only 16 MiB; v7x physical is 64 MiB).
    tile_bytes = Bb * (Dd + T * De + Wp + 2 * T * max(A, De)) * 4
    vmem_limit = int(min(32 << 20, max(16 << 20, 3 * tile_bytes)))

    packed = pl.pallas_call(
        attention_kernel,
        out_shape=jax.ShapeDtypeStruct((B_eff, Wp), jnp.float32),
        grid_spec=pltpu.PrefetchScalarGridSpec(
            num_scalar_prefetch=0,
            grid=(B_eff // Bb,),
            in_specs=[
                pl.BlockSpec((Bb, Dd), lambda i: (i, 0)),        # Si_1 block
                pl.BlockSpec((Bb, T, De), lambda i: (i, 0, 0)),  # Hj block (streamed)
                pl.BlockSpec((Dd, A), lambda i: (0, 0)),         # W^T (resident)
                pl.BlockSpec((De, A), lambda i: (0, 0)),         # V^T (resident)
                pl.BlockSpec((1, A), lambda i: (0, 0)),          # fc weight row
                pl.BlockSpec((1, A), lambda i: (0, 0)),          # b parameter
                pl.BlockSpec(memory_space=pltpu.MemorySpace.SMEM),  # fc bias scalar
            ],
            out_specs=pl.BlockSpec((Bb, Wp), lambda i: (i, 0)),  # packed [ctx|attn]
        ),
        compiler_params=pltpu.CompilerParams(
            dimension_semantics=("parallel",),
            vmem_limit_bytes=vmem_limit,
        ),
    )(si2d, hj_in, wt, vt, fcw_row, b2, fcb2)

    ctx = packed[:B, :De].reshape(B, 1, De)
    attn = packed[:B, De:De + T]
    return ctx, attn


def reference_forward(si, hj, w, v, fc_w, fc_b, b):
    s = jnp.einsum('bqd,ad->bqa', si, w)            # W(Si_1)
    h = jnp.einsum('btd,ad->bta', hj, v)            # V(Hj)
    z = jnp.tanh(s + h + b)
    score = (jnp.einsum('bta,oa->bto', z, fc_w) + fc_b).squeeze(-1)   # (B, T)
    attn = jax.nn.softmax(score, axis=-1)
    ctx = jnp.einsum('bt,btd->bd', attn, hj)[:, None, :]
    return ctx, attn


if __name__ == "__main__":
    B, T = 2, 8
    dec_hidden_dim, enc_hidden_dim, attn_dim = 32, 32, 16

    key = jax.random.PRNGKey(0)
    k_si, k_hj, k_w, k_v, k_fw, k_fb, k_b = jax.random.split(key, 7)

    Si_1 = jax.random.normal(k_si, (B, 1, dec_hidden_dim), dtype=jnp.float32)
    Hj = jax.random.normal(k_hj, (B, T, enc_hidden_dim), dtype=jnp.float32)

    # Deterministic parameter init (shapes follow nn.Linear conventions).
    W = jax.random.normal(k_w, (attn_dim, dec_hidden_dim), dtype=jnp.float32) * 0.1
    V = jax.random.normal(k_v, (attn_dim, enc_hidden_dim), dtype=jnp.float32) * 0.1
    fc_w = jax.random.normal(k_fw, (1, attn_dim), dtype=jnp.float32) * 0.1
    fc_b = jax.random.normal(k_fb, (1,), dtype=jnp.float32) * 0.1
    b = jax.random.uniform(k_b, (attn_dim,), dtype=jnp.float32)

    ctx, attn = attention_forward(Si_1, Hj, W, V, fc_w, fc_b, b)
    ctx = jax.block_until_ready(ctx)
    attn = jax.block_until_ready(attn)

    ctx_ref, attn_ref = reference_forward(Si_1, Hj, W, V, fc_w, fc_b, b)

    np.testing.assert_allclose(np.asarray(ctx), np.asarray(ctx_ref),
                               rtol=1e-5, atol=1e-5)
    np.testing.assert_allclose(np.asarray(attn), np.asarray(attn_ref),
                               rtol=1e-5, atol=1e-5)

    assert ctx.shape == (B, 1, enc_hidden_dim)
    assert attn.shape == (B, T)
    print("KERNEL_OK")
</pallas_src>

<mosaic_0001>
module attributes {stable_mosaic.version = 11 : i64} {
  func.func @attention_kernel(%arg0: i32, %arg1: memref<8x32xf32, #tpu.memory_space<vmem>>, %arg2: memref<8x8x32xf32, #tpu.memory_space<vmem>>, %arg3: memref<32x16xf32, #tpu.memory_space<vmem>>, %arg4: memref<32x16xf32, #tpu.memory_space<vmem>>, %arg5: memref<1x16xf32, #tpu.memory_space<vmem>>, %arg6: memref<1x16xf32, #tpu.memory_space<vmem>>, %arg7: memref<1x1xf32, #tpu.memory_space<smem>>, %arg8: memref<8x128xf32, #tpu.memory_space<vmem>>) attributes {dimension_semantics = [#tpu.dimension_semantics<parallel>], iteration_bounds = array<i64: 1>, scalar_prefetch = 0 : i64, scratch_operands = 0 : i64, tpu.core_type = #tpu.core_type<tc>, window_params = [{transform_indices = @transform_0, window_bounds = array<i64: 8, 32>}, {transform_indices = @transform_1, window_bounds = array<i64: 8, 8, 32>}, {pipeline_mode = #tpu.pipeline_mode<synchronous>, transform_indices = @transform_2, window_bounds = array<i64: 32, 16>}, {pipeline_mode = #tpu.pipeline_mode<synchronous>, transform_indices = @transform_3, window_bounds = array<i64: 32, 16>}, {pipeline_mode = #tpu.pipeline_mode<synchronous>, transform_indices = @transform_4, window_bounds = array<i64: 1, 16>}, {pipeline_mode = #tpu.pipeline_mode<synchronous>, transform_indices = @transform_5, window_bounds = array<i64: 1, 16>}, {transform_indices = @transform_6, window_bounds = array<i64: 1, 1>}, {transform_indices = @transform_7, window_bounds = array<i64: 8, 128>}]} {
    %c0 = arith.constant 0 : index
    %c0_0 = arith.constant 0 : index
    %0 = vector.load %arg1[%c0, %c0_0] : memref<8x32xf32, #tpu.memory_space<vmem>>, vector<8x32xf32>
    %c0_1 = arith.constant 0 : index
    %c0_2 = arith.constant 0 : index
    %c0_3 = arith.constant 0 : index
    %1 = vector.load %arg2[%c0_1, %c0_2, %c0_3] : memref<8x8x32xf32, #tpu.memory_space<vmem>>, vector<8x8x32xf32>
    %c0_4 = arith.constant 0 : index
    %c0_5 = arith.constant 0 : index
    %2 = vector.load %arg3[%c0_4, %c0_5] : memref<32x16xf32, #tpu.memory_space<vmem>>, vector<32x16xf32>
    %cst = arith.constant dense<0.000000e+00> : vector<8x16xf32>
    %3 = tpu.matmul %0, %2, %cst {dimension_numbers = #tpu.dot_dimension_numbers<[1], [0], [0], [1], [0, 0, 1, 1], [], []>} : vector<8x32xf32>, vector<32x16xf32>, vector<8x16xf32> -> vector<8x16xf32>
    %c0_6 = arith.constant 0 : index
    %c0_7 = arith.constant 0 : index
    %4 = vector.load %arg4[%c0_6, %c0_7] : memref<32x16xf32, #tpu.memory_space<vmem>>, vector<32x16xf32>
    %cst_8 = arith.constant dense<0.000000e+00> : vector<8x8x16xf32>
    %5 = tpu.matmul %1, %4, %cst_8 {dimension_numbers = #tpu.dot_dimension_numbers<[2], [0], [0, 1], [1], [0, 0, 0, 1, 1, 1], [], []>} : vector<8x8x32xf32>, vector<32x16xf32>, vector<8x8x16xf32> -> vector<8x8x16xf32>
    %6 = vector.shape_cast %3 : vector<8x16xf32> to vector<8x1x16xf32>
    %7 = vector.broadcast %6 : vector<8x1x16xf32> to vector<8x8x16xf32>
    %8 = arith.addf %7, %5 : vector<8x8x16xf32>
    %c0_9 = arith.constant 0 : index
    %c0_10 = arith.constant 0 : index
    %9 = vector.load %arg6[%c0_9, %c0_10] : memref<1x16xf32, #tpu.memory_space<vmem>>, vector<1x16xf32>
    %10 = vector.shape_cast %9 : vector<1x16xf32> to vector<1x1x16xf32>
    %11 = vector.broadcast %10 : vector<1x1x16xf32> to vector<8x8x16xf32>
    %12 = arith.addf %8, %11 : vector<8x8x16xf32>
    %13 = math.tanh %12 : vector<8x8x16xf32>
    %c0_11 = arith.constant 0 : index
    %c0_12 = arith.constant 0 : index
    %14 = vector.load %arg5[%c0_11, %c0_12] : memref<1x16xf32, #tpu.memory_space<vmem>>, vector<1x16xf32>
    %15 = vector.shape_cast %14 : vector<1x16xf32> to vector<1x1x16xf32>
    %16 = vector.broadcast %15 : vector<1x1x16xf32> to vector<8x8x16xf32>
    %17 = arith.mulf %13, %16 : vector<8x8x16xf32>
    %cst_13 = arith.constant dense<0.000000e+00> : vector<8x8xf32>
    %18 = vector.multi_reduction <add>, %17, %cst_13 [2] : vector<8x8x16xf32> to vector<8x8xf32>
    %c0_14 = arith.constant 0 : index
    %c0_15 = arith.constant 0 : index
    %19 = memref.load %arg7[%c0_14, %c0_15] : memref<1x1xf32, #tpu.memory_space<smem>>
    %20 = vector.broadcast %19 : f32 to vector<8x8xf32>
    %21 = arith.addf %18, %20 : vector<8x8xf32>
    %cst_16 = arith.constant dense<0xFF800000> : vector<8xf32>
    %22 = vector.multi_reduction <maximumf>, %21, %cst_16 [1] : vector<8x8xf32> to vector<8xf32>
    %23 = vector.shape_cast %22 : vector<8xf32> to vector<8x1xf32>
    %24 = vector.broadcast %23 : vector<8x1xf32> to vector<8x8xf32>
    %25 = arith.subf %21, %24 : vector<8x8xf32>
    %26 = math.exp %25 : vector<8x8xf32>
    %cst_17 = arith.constant dense<0.000000e+00> : vector<8xf32>
    %27 = vector.multi_reduction <add>, %26, %cst_17 [1] : vector<8x8xf32> to vector<8xf32>
    %28 = vector.shape_cast %27 : vector<8xf32> to vector<8x1xf32>
    %29 = tpu.reciprocal %28 : vector<8x1xf32> -> vector<8x1xf32>
    %30 = vector.broadcast %29 : vector<8x1xf32> to vector<8x8xf32>
    %31 = arith.mulf %26, %30 : vector<8x8xf32>
    %32 = vector.shape_cast %31 : vector<8x8xf32> to vector<8x8x1xf32>
    %33 = vector.broadcast %32 : vector<8x8x1xf32> to vector<8x8x32xf32>
    %34 = arith.mulf %33, %1 : vector<8x8x32xf32>
    %cst_18 = arith.constant dense<0.000000e+00> : vector<8x32xf32>
    %35 = vector.multi_reduction <add>, %34, %cst_18 [1] : vector<8x8x32xf32> to vector<8x32xf32>
    %cst_19 = arith.constant 0.000000e+00 : f32
    %36 = vector.broadcast %cst_19 : f32 to vector<8x88xf32>
    %37 = tpu.concatenate %35, %31, %36 in 1 : vector<8x32xf32>, vector<8x8xf32>, vector<8x88xf32> -> vector<8x128xf32>
    %c0_20 = arith.constant 0 : index
    %c0_21 = arith.constant 0 : index
    %38 = vector.load %arg8[%c0_20, %c0_21] : memref<8x128xf32, #tpu.memory_space<vmem>>, vector<8x128xf32>
    tpu.vector_store %arg8[%c0_20, %c0_21], %37 {strides = array<i32>} : memref<8x128xf32, #tpu.memory_space<vmem>>, vector<8x128xf32>,
    return
  }
  func.func @transform_0(%arg0: i32) -> (i32, i32) {
    %c0_i32 = arith.constant 0 : i32
    %c0_i32_0 = arith.constant 0 : i32
    return %arg0, %c0_i32 : i32, i32
  }
  func.func @transform_1(%arg0: i32) -> (i32, i32, i32) {
    %c0_i32 = arith.constant 0 : i32
    %c0_i32_0 = arith.constant 0 : i32
    %c0_i32_1 = arith.constant 0 : i32
    return %arg0, %c0_i32, %c0_i32_0 : i32, i32, i32
  }
  func.func @transform_2(%arg0: i32) -> (i32, i32) {
    %c0_i32 = arith.constant 0 : i32
    %c0_i32_0 = arith.constant 0 : i32
    %c0_i32_1 = arith.constant 0 : i32
    return %c0_i32, %c0_i32_0 : i32, i32
  }
  func.func @transform_3(%arg0: i32) -> (i32, i32) {
    %c0_i32 = arith.constant 0 : i32
    %c0_i32_0 = arith.constant 0 : i32
    %c0_i32_1 = arith.constant 0 : i32
    return %c0_i32, %c0_i32_0 : i32, i32
  }
  func.func @transform_4(%arg0: i32) -> (i32, i32) {
    %c0_i32 = arith.constant 0 : i32
    %c0_i32_0 = arith.constant 0 : i32
    %c0_i32_1 = arith.constant 0 : i32
    return %c0_i32, %c0_i32_0 : i32, i32
  }
  func.func @transform_5(%arg0: i32) -> (i32, i32) {
    %c0_i32 = arith.constant 0 : i32
    %c0_i32_0 = arith.constant 0 : i32
    %c0_i32_1 = arith.constant 0 : i32
    return %c0_i32, %c0_i32_0 : i32, i32
  }
  func.func @transform_6(%arg0: i32) -> (i32, i32) {
    %c0_i32 = arith.constant 0 : i32
    %c0_i32_0 = arith.constant 0 : i32
    %c0_i32_1 = arith.constant 0 : i32
    return %c0_i32, %c0_i32_0 : i32, i32
  }
  func.func @transform_7(%arg0: i32) -> (i32, i32) {
    %c0_i32 = arith.constant 0 : i32
    %c0_i32_0 = arith.constant 0 : i32
    return %arg0, %c0_i32 : i32, i32
  }
}

</mosaic_0001>

<llo_original>
// kernel: tpu_custom_call.1
$region0: #{tpu_custom_call.1}
  #allocation0 [shape = 'u32[]', space=smem, size = 0x4, offset = 0x4, fixed_abs, tag = 'smem constant byte address 0x4 - core index']
  #allocation1 [shape = 'u32[144,128]{1,0:T(1,128)}', space=vmem, size = 0x12000, scoped, tag = 'internal scratch']
  #allocation2 [shape = 'f32[1,1]{1,0:T(1,128)S(6)}', space=smem, size = 0x200, scoped, tag = 'scoped memory for tpu_custom_call.1']
  %s0 = inlined_call_operand.vmem [shape: f32[8,32], index: 0, kind: input, shape index: {}]
  %s1 = inlined_call_operand.vmem [shape: f32[8,8,32], index: 1, kind: input, shape index: {}]
  %s2 = inlined_call_operand.vmem [shape: f32[32,16], index: 2, kind: input, shape index: {}]
  %s3 = inlined_call_operand.vmem [shape: f32[32,16], index: 3, kind: input, shape index: {}]
  %s4 = inlined_call_operand.vmem [shape: f32[1,16], index: 4, kind: input, shape index: {}]
  %s5 = inlined_call_operand.vmem [shape: f32[1,16], index: 5, kind: input, shape index: {}]
  %s6 = inlined_call_operand.<no memory space> [shape: f32[1,1], index: 6, kind: input, shape index: {}]
  %s7 = inlined_call_operand.hbm [shape: f32[8,128], index: 7, kind: output, shape index: {}]
  %s8 = sld [smem:[#allocation0]]
  $region38: #{tpu_custom_call.1} parent=0
    _
  %s10 = ssub.s32 1, %s8
  %s11 = scalar_select 0, %s10, %s8
  %12 = sst [smem:[#allocation2]] %s6
  $region1: #{tpu_custom_call.1} parent=0
    #allocation3 [shape = 'u8[4096]{0}', space=vmem, size = 0x1000, scoped, tag = 'output window, operand 0, single buffered']
    #allocation4 [shape = 's32[1]{0}', space=sflag, size = 0x4, scoped, tag = 'scoped memory for tpu_custom_call.1']
    %13 = vsyncpa [#allocation4], 0
    // Predicated region
    $region2: #{tpu_custom_call.1} parent=1 // pred_check
      _
    $region3: #{tpu_custom_call.1} parent=1 // pred_check_branch
      %15 = sbr.rel (0) target = $region5
    $region4: #{tpu_custom_call.1} parent=1 // pred_region
      _
    $region5: #{tpu_custom_call.1} parent=1 // pred_fallthru
      _
    // Predicated region
    $region6: #{tpu_custom_call.1} parent=1 // pred_check
      _
    $region7: #{tpu_custom_call.1} parent=1 // pred_check_branch
      %17 = sbr.rel (0) target = $region9
    $region8: #{tpu_custom_call.1} parent=1 // pred_region
      _
    $region9: #{tpu_custom_call.1} parent=1 // pred_fallthru
      _
    // Predicated region
    $region10: #{tpu_custom_call.1} parent=1 // pred_check
      _
    $region11: #{tpu_custom_call.1} parent=1 // pred_check_branch
      %19 = sbr.rel (0) target = $region13
    $region12: #{tpu_custom_call.1} parent=1 // pred_region
      _
    $region13: #{tpu_custom_call.1} parent=1 // pred_fallthru
      _
    // Predicated region
    $region14: #{tpu_custom_call.1} parent=1 // pred_check
      _
    $region15: #{tpu_custom_call.1} parent=1 // pred_check_branch
      %21 = sbr.rel (0) target = $region17
    $region16: #{tpu_custom_call.1} parent=1 // pred_region
      _
    $region17: #{tpu_custom_call.1} parent=1 // pred_fallthru
      _
    // Predicated region
    $region18: #{tpu_custom_call.1} parent=1 // pred_check
      _
    $region19: #{tpu_custom_call.1} parent=1 // pred_check_branch
      %23 = sbr.rel (0) target = $region21
    $region20: #{tpu_custom_call.1} parent=1 // pred_region
      _
    $region21: #{tpu_custom_call.1} parent=1 // pred_fallthru
      _
    // Predicated region
    $region22: #{tpu_custom_call.1} parent=1 // pred_check
      _
    $region23: #{tpu_custom_call.1} parent=1 // pred_check_branch
      %25 = sbr.rel (0) target = $region25
    $region24: #{tpu_custom_call.1} parent=1 // pred_region
      _
    $region25: #{tpu_custom_call.1} parent=1 // pred_fallthru
      _
    // Predicated region
    $region26: #{tpu_custom_call.1} parent=1 // pred_check
      _
    $region27: #{tpu_custom_call.1} parent=1 // pred_check_branch
      %27 = sbr.rel (0) target = $region29
    $region28: #{tpu_custom_call.1} parent=1 // pred_region
      _
    $region29: #{tpu_custom_call.1} parent=1 // pred_fallthru
      _
    %v28 = vld [vmem:[%s0] sm:$0xff]
    %v29 = vld [vmem:[%s1] sm:$0xff]
    %v30 = vld [vmem:[%s1 + $0x8] sm:$0xff]
    %v31 = vld [vmem:[%s1 + $0x10] sm:$0xff]
    %v32 = vld [vmem:[%s1 + $0x18] sm:$0xff]
    %v33 = vld [vmem:[%s1 + $0x20] sm:$0xff]
    %v34 = vld [vmem:[%s1 + $0x28] sm:$0xff]
    %v35 = vld [vmem:[%s1 + $0x30] sm:$0xff]
    %v36 = vld [vmem:[%s1 + $0x38] sm:$0xff]
    %v37 = vld [vmem:[%s2] sm:$0xff]
    %v38 = vld [vmem:[%s2 + $0x8] sm:$0xff]
    %v39 = vld [vmem:[%s2 + $0x10] sm:$0xff]
    %v40 = vld [vmem:[%s2 + $0x18] sm:$0xff]
    %vm41 = vcmask 261120
    %v43 = vsel %vm41, %v28, 0
    %45 = vmatprep.subr.mxu0 0.0
    %46 = vmatpush1.msra.mxu0 %v37
    %47 = vmatprep.subr.mxu0 0.0
    %48 = vmatpush1.msra.mxu0 %v38
    %49 = vmatprep.subr.mxu0 0.0
    %50 = vmatpush1.msra.mxu0 %v39
    %51 = vmatprep.subr.mxu0 0.0
    %52 = vmatpush1.msra.mxu0 %v40
    %53 = vmatprep.subr.mxu0 0.0
    %54 = vmatpush1.msra.mxu0 0.0
    %55 = vmatprep.subr.mxu0 0.0
    %56 = vmatpush1.msra.mxu0 0.0
    %57 = vmatprep.subr.mxu0 0.0
    %58 = vmatpush1.msra.mxu0 0.0
    %59 = vmatprep.subr.mxu0 0.0
    %60 = vmatpush1.msra.mxu0 0.0
    %61 = vmatprep.subr.mxu0 0.0
    %62 = vmatpush1.msra.mxu0 0.0
    %63 = vmatprep.subr.mxu0 0.0
    %64 = vmatpush1.msra.mxu0 0.0
    %65 = vmatprep.subr.mxu0 0.0
    %66 = vmatpush1.msra.mxu0 0.0
    %67 = vmatprep.subr.mxu0 0.0
    %68 = vmatpush1.msra.mxu0 0.0
    %69 = vmatprep.subr.mxu0 0.0
    %70 = vmatpush1.msra.mxu0 0.0
    %71 = vmatprep.subr.mxu0 0.0
    %72 = vmatpush1.msra.mxu0 0.0
    %73 = vmatprep.subr.mxu0 0.0
    %74 = vmatpush1.msra.mxu0 0.0
    %75 = vmatprep.subr.mxu0 0.0
    %76 = vmatpush1.msra.mxu0 0.0
    %77 = vmatprep.subr.mxu0 0.0
    %78 = vmatpush1.msra.mxu0 0.0
    %79 = vmatprep.subr.mxu0 0.0
    %80 = vmatpush1.msra.mxu0 0.0
    %81 = vmatprep.subr.mxu0 0.0
    %82 = vmatpush1.msra.mxu0 0.0
    %83 = vmatprep.subr.mxu0 0.0
    %84 = vmatpush1.msra.mxu0 0.0
    %85 = vmatprep.subr.mxu0 0.0
    %86 = vmatpush1.msra.mxu0 0.0
    %87 = vmatprep.subr.mxu0 0.0
    %88 = vmatpush1.msra.mxu0 0.0
    %89 = vmatprep.subr.mxu0 0.0
    %90 = vmatpush1.msra.mxu0 0.0
    %91 = vmatprep.subr.mxu0 0.0
    %92 = vmatpush1.msra.mxu0 0.0
    %93 = vmatprep.subr.mxu0 0.0
    %94 = vmatpush1.msra.mxu0 0.0
    %95 = vmatprep.subr.mxu0 0.0
    %96 = vmatpush1.msra.mxu0 0.0
    %97 = vmatprep.subr.mxu0 0.0
    %98 = vmatpush1.msra.mxu0 0.0
    %99 = vmatprep.subr.mxu0 0.0
    %100 = vmatpush1.msra.mxu0 0.0
    %101 = vmatprep.subr.mxu0 0.0
    %102 = vmatpush1.msra.mxu0 0.0
    %103 = vmatprep.subr.mxu0 0.0
    %104 = vmatpush1.msra.mxu0 0.0
    %105 = vmatprep.subr.mxu0 0.0
    %106 = vmatpush1.msra.mxu0 0.0
    %107 = vmatprep.subr.mxu0 0.0
    %108 = vmatpush1.msra.mxu0 0.0
    %109 = vmatprep.mubr.f32.mxu0 0.0
    %110 = vmatmul.mubr.f32.gmra.mrb[0].mxu0 %v43
    %v111 = vpop.f32.mrb[0].mxu0
    %v112 = vadd.f32 0.0, %v111
    %v113 = vpop.f32.mrb[0].mxu0
    %114 = vdwg.mxu0
    %v115 = vld [vmem:[%s3] sm:$0xff]
    %v116 = vld [vmem:[%s3 + $0x8] sm:$0xff]
    %v117 = vld [vmem:[%s3 + $0x10] sm:$0xff]
    %v118 = vld [vmem:[%s3 + $0x18] sm:$0xff]
    %v120 = vsel %vm41, %v29, 0
    %v123 = vsel %vm41, %v30, 0
    %v126 = vsel %vm41, %v31, 0
    %v129 = vsel %vm41, %v32, 0
    %v132 = vsel %vm41, %v33, 0
    %v135 = vsel %vm41, %v34, 0
    %v138 = vsel %vm41, %v35, 0
    %v141 = vsel %vm41, %v36, 0
    %143 = vmatprep.subr.mxu0 0.0
    %144 = vmatpush1.msra.mxu0 %v115
    %145 = vmatprep.subr.mxu0 0.0
    %146 = vmatpush1.msra.mxu0 %v116
    %147 = vmatprep.subr.mxu0 0.0
    %148 = vmatpush1.msra.mxu0 %v117
    %149 = vmatprep.subr.mxu0 0.0
    %150 = vmatpush1.msra.mxu0 %v118
    %151 = vmatprep.subr.mxu0 0.0
    %152 = vmatpush1.msra.mxu0 0.0
    %153 = vmatprep.subr.mxu0 0.0
    %154 = vmatpush1.msra.mxu0 0.0
    %155 = vmatprep.subr.mxu0 0.0
    %156 = vmatpush1.msra.mxu0 0.0
    %157 = vmatprep.subr.mxu0 0.0
    %158 = vmatpush1.msra.mxu0 0.0
    %159 = vmatprep.subr.mxu0 0.0
    %160 = vmatpush1.msra.mxu0 0.0
    %161 = vmatprep.subr.mxu0 0.0
    %162 = vmatpush1.msra.mxu0 0.0
    %163 = vmatprep.subr.mxu0 0.0
    %164 = vmatpush1.msra.mxu0 0.0
    %165 = vmatprep.subr.mxu0 0.0
    %166 = vmatpush1.msra.mxu0 0.0
    %167 = vmatprep.subr.mxu0 0.0
    %168 = vmatpush1.msra.mxu0 0.0
    %169 = vmatprep.subr.mxu0 0.0
    %170 = vmatpush1.msra.mxu0 0.0
    %171 = vmatprep.subr.mxu0 0.0
    %172 = vmatpush1.msra.mxu0 0.0
    %173 = vmatprep.subr.mxu0 0.0
    %174 = vmatpush1.msra.mxu0 0.0
    %175 = vmatprep.subr.mxu0 0.0
    %176 = vmatpush1.msra.mxu0 0.0
    %177 = vmatprep.subr.mxu0 0.0
    %178 = vmatpush1.msra.mxu0 0.0
    %179 = vmatprep.subr.mxu0 0.0
    %180 = vmatpush1.msra.mxu0 0.0
    %181 = vmatprep.subr.mxu0 0.0
    %182 = vmatpush1.msra.mxu0 0.0
    %183 = vmatprep.subr.mxu0 0.0
    %184 = vmatpush1.msra.mxu0 0.0
    %185 = vmatprep.subr.mxu0 0.0
    %186 = vmatpush1.msra.mxu0 0.0
    %187 = vmatprep.subr.mxu0 0.0
    %188 = vmatpush1.msra.mxu0 0.0
    %189 = vmatprep.subr.mxu0 0.0
    %190 = vmatpush1.msra.mxu0 0.0
    %191 = vmatprep.subr.mxu0 0.0
    %192 = vmatpush1.msra.mxu0 0.0
    %193 = vmatprep.subr.mxu0 0.0
    %194 = vmatpush1.msra.mxu0 0.0
    %195 = vmatprep.subr.mxu0 0.0
    %196 = vmatpush1.msra.mxu0 0.0
    %197 = vmatprep.subr.mxu0 0.0
    %198 = vmatpush1.msra.mxu0 0.0
    %199 = vmatprep.subr.mxu0 0.0
    %200 = vmatpush1.msra.mxu0 0.0
    %201 = vmatprep.subr.mxu0 0.0
    %202 = vmatpush1.msra.mxu0 0.0
    %203 = vmatprep.subr.mxu0 0.0
    %204 = vmatpush1.msra.mxu0 0.0
    %205 = vmatprep.subr.mxu0 0.0
    %206 = vmatpush1.msra.mxu0 0.0
    %207 = vmatprep.mubr.f32.mxu0 0.0
    %208 = vmatmul.mubr.f32.gmra.mrb[0].mxu0 %v120
    %v209 = vpop.f32.mrb[0].mxu0
    %v210 = vadd.f32 0.0, %v209
    %v211 = vpop.f32.mrb[0].mxu0
    %212 = vmatprep.mubr.f32.mxu0 0.0
    %213 = vmatmul.mubr.f32.gmra.mrb[0].mxu0 %v123
    %v214 = vpop.f32.mrb[0].mxu0
    %v215 = vadd.f32 0.0, %v214
    %v216 = vpop.f32.mrb[0].mxu0
    %217 = vmatprep.mubr.f32.mxu0 0.0
    %218 = vmatmul.mubr.f32.gmra.mrb[0].mxu0 %v126
    %v219 = vpop.f32.mrb[0].mxu0
    %v220 = vadd.f32 0.0, %v219
    %v221 = vpop.f32.mrb[0].mxu0
    %222 = vmatprep.mubr.f32.mxu0 0.0
    %223 = vmatmul.mubr.f32.gmra.mrb[0].mxu0 %v129
    %v224 = vpop.f32.mrb[0].mxu0
    %v225 = vadd.f32 0.0, %v224
    %v226 = vpop.f32.mrb[0].mxu0
    %227 = vmatprep.mubr.f32.mxu0 0.0
    %228 = vmatmul.mubr.f32.gmra.mrb[0].mxu0 %v132
    %v229 = vpop.f32.mrb[0].mxu0
    %v230 = vadd.f32 0.0, %v229
    %v231 = vpop.f32.mrb[0].mxu0
    %232 = vmatprep.mubr.f32.mxu0 0.0
    %233 = vmatmul.mubr.f32.gmra.mrb[0].mxu0 %v135
    %v234 = vpop.f32.mrb[0].mxu0
    %v235 = vadd.f32 0.0, %v234
    %v236 = vpop.f32.mrb[0].mxu0
    %237 = vmatprep.mubr.f32.mxu0 0.0
    %238 = vmatmul.mubr.f32.gmra.mrb[0].mxu0 %v138
    %v239 = vpop.f32.mrb[0].mxu0
    %v240 = vadd.f32 0.0, %v239
    %v241 = vpop.f32.mrb[0].mxu0
    %242 = vmatprep.mubr.f32.mxu0 0.0
    %243 = vmatmul.mubr.f32.gmra.mrb[0].mxu0 %v141
    %v244 = vpop.f32.mrb[0].mxu0
    %v245 = vadd.f32 0.0, %v244
    %v246 = vpop.f32.mrb[0].mxu0
    %247 = vdwg.mxu0
    %v249 = vcombine.high %v112, %v112
    %v251 = vunpack.c.l.s4 1966171168
    %v252 = vunpack.c.0.s8 %v251
    %v253 = vlaneseq
    %v254 = vshrl.u32 %v253, 7
    %v255 = vsub.s32 %v252, %v254
    %v256 = vrot.slane %v112, %v255
    %v258 = vunpack.c.l.s4 1966171168
    %v259 = vunpack.c.0.s8 %v258
    %v260 = vlaneseq
    %v261 = vshrl.u32 %v260, 7
    %v262 = vsub.s32 %v259, %v261
    %v263 = vrot.slane %v249, %v262
    %v264 = vcombine.high %v256, %v256
    %v265 = vcombine.high %v263, %v263
    %v267 = vunpack.c.l.s4 1966171168
    %v268 = vunpack.c.0.s8 %v267
    %v269 = vlaneseq
    %v270 = vshrl.u32 %v269, 7
    %v271 = vsub.s32 %v268, %v270
    %v272 = vrot.slane %v256, %v271
    %v274 = vunpack.c.l.s4 1966171168
    %v275 = vunpack.c.0.s8 %v274
    %v276 = vlaneseq
    %v277 = vshrl.u32 %v276, 7
    %v278 = vsub.s32 %v275, %v277
    %v279 = vrot.slane %v263, %v278
    %v281 = vunpack.c.l.s4 1966171168
    %v282 = vunpack.c.0.s8 %v281
    %v283 = vlaneseq
    %v284 = vshrl.u32 %v283, 7
    %v285 = vsub.s32 %v282, %v284
    %v286 = vrot.slane %v264, %v285
    %v288 = vunpack.c.l.s4 1966171168
    %v289 = vunpack.c.0.s8 %v288
    %v290 = vlaneseq
    %v291 = vshrl.u32 %v290, 7
    %v292 = vsub.s32 %v289, %v291
    %v293 = vrot.slane %v265, %v292
    %v294 = vcombine.high %v272, %v272
    %v295 = vcombine.high %v279, %v279
    %v296 = vcombine.high %v286, %v286
    %v297 = vcombine.high %v293, %v293
    %v298 = vlaneseq
    %v299 = vshrl.u32 %v298, 7
    %v300 = vsub.s32 0, %v299
    %v301 = vrot.slane %v272, %v300
    %v302 = vlaneseq
    %v303 = vshrl.u32 %v302, 7
    %v304 = vsub.s32 0, %v303
    %v305 = vrot.slane %v286, %v304
    %v306 = vlaneseq
    %v307 = vshrl.u32 %v306, 7
    %v308 = vsub.s32 0, %v307
    %v309 = vrot.slane %v294, %v308
    %v310 = vlaneseq
    %v311 = vshrl.u32 %v310, 7
    %v312 = vsub.s32 0, %v311
    %v313 = vrot.slane %v296, %v312
    %v314 = vlaneseq
    %v315 = vshrl.u32 %v314, 7
    %v316 = vsub.s32 0, %v315
    %v317 = vrot.slane %v279, %v316
    %v318 = vlaneseq
    %v319 = vshrl.u32 %v318, 7
    %v320 = vsub.s32 0, %v319
    %v321 = vrot.slane %v293, %v320
    %v322 = vlaneseq
    %v323 = vshrl.u32 %v322, 7
    %v324 = vsub.s32 0, %v323
    %v325 = vrot.slane %v295, %v324
    %v326 = vlaneseq
    %v327 = vshrl.u32 %v326, 7
    %v328 = vsub.s32 0, %v327
    %v329 = vrot.slane %v297, %v328
    %v338 = vadd.f32 %v301, %v210
    %v339 = vadd.f32 %v305, %v215
    %v340 = vadd.f32 %v309, %v220
    %v341 = vadd.f32 %v313, %v225
    %v342 = vadd.f32 %v317, %v230
    %v343 = vadd.f32 %v321, %v235
    %v344 = vadd.f32 %v325, %v240
    %v345 = vadd.f32 %v329, %v245
    %v346 = vld [vmem:[%s5] sm:$0x1]
    %v348 = vlaneseq
    %v349 = vshrl.u32 %v348, 7
    %v350 = vsub.s32 0, %v349
    %v351 = vrot.slane %v346, %v350
    %v353 = vadd.f32 %v338, %v351
    %v354 = vadd.f32 %v339, %v351
    %v355 = vadd.f32 %v340, %v351
    %v356 = vadd.f32 %v341, %v351
    %v357 = vadd.f32 %v342, %v351
    %v358 = vadd.f32 %v343, %v351
    %v359 = vadd.f32 %v344, %v351
    %v360 = vadd.f32 %v345, %v351
    %v361 = vtanh.pop %v353
    %v362 = vtanh.pop %v354
    %v363 = vtanh.pop %v355
    %v364 = vtanh.pop %v356
    %v365 = vtanh.pop %v357
    %v366 = vtanh.pop %v358
    %v367 = vtanh.pop %v359
    %v368 = vtanh.pop %v360
    %v369 = vld [vmem:[%s4] sm:$0x1]
    %v371 = vlaneseq
    %v372 = vshrl.u32 %v371, 7
    %v373 = vsub.s32 0, %v372
    %v374 = vrot.slane %v369, %v373
    %v376 = vmul.f32 %v361, %v374
    %v377 = vmul.f32 %v362, %v374
    %v378 = vmul.f32 %v363, %v374
    %v379 = vmul.f32 %v364, %v374
    %v380 = vmul.f32 %v365, %v374
    %v381 = vmul.f32 %v366, %v374
    %v382 = vmul.f32 %v367, %v374
    %v383 = vmul.f32 %v368, %v374
    %vm384 = vcmask 130048
    %v385 = vsel %vm384, %v376, 0.0
    %386 = vadd.xlane.f32.xlu0 %v385
    %v387 = vpop.xlane.xlu0 %386
    %v388 = vsel %vm384, %v377, 0.0
    %389 = vadd.xlane.f32.xlu0 %v388
    %v390 = vpop.xlane.xlu0 %389
    %v391 = vsel %vm384, %v378, 0.0
    %392 = vadd.xlane.f32.xlu0 %v391
    %v393 = vpop.xlane.xlu0 %392
    %v394 = vsel %vm384, %v379, 0.0
    %395 = vadd.xlane.f32.xlu0 %v394
    %v396 = vpop.xlane.xlu0 %395
    %v397 = vsel %vm384, %v380, 0.0
    %398 = vadd.xlane.f32.xlu0 %v397
    %v399 = vpop.xlane.xlu0 %398
    %v400 = vsel %vm384, %v381, 0.0
    %401 = vadd.xlane.f32.xlu0 %v400
    %v402 = vpop.xlane.xlu0 %401
    %v403 = vsel %vm384, %v382, 0.0
    %404 = vadd.xlane.f32.xlu0 %v403
    %v405 = vpop.xlane.xlu0 %404
    %v406 = vsel %vm384, %v383, 0.0
    %407 = vadd.xlane.f32.xlu0 %v406
    %v408 = vpop.xlane.xlu0 %407
    %s409 = sld [smem:[#allocation2]]
    %v410 = vstv %s409
    %v411 = vadd.f32 %v387, %v410
    %v412 = vadd.f32 %v390, %v410
    %v413 = vadd.f32 %v393, %v410
    %v414 = vadd.f32 %v396, %v410
    %v415 = vadd.f32 %v399, %v410
    %v416 = vadd.f32 %v402, %v410
    %v417 = vadd.f32 %v405, %v410
    %v418 = vadd.f32 %v408, %v410
    %v427 = vlaneseq
    %v428 = vand.u32 %v427, 127
    %v429 = vlaneseq
    %v430 = vshrl.u32 %v429, 7
    %v431 = vsub.s32 %v428, %v430
    %v432 = vrot.slane %v411, %v431
    %v433 = vlaneseq
    %v434 = vshrl.u32 %v433, 7
    %v435 = vsub.s32 %v428, %v434
    %v436 = vrot.slane %v412, %v435
    %v437 = vlaneseq
    %v438 = vshrl.u32 %v437, 7
    %v439 = vsub.s32 %v428, %v438
    %v440 = vrot.slane %v413, %v439
    %v441 = vlaneseq
    %v442 = vshrl.u32 %v441, 7
    %v443 = vsub.s32 %v428, %v442
    %v444 = vrot.slane %v414, %v443
    %v445 = vlaneseq
    %v446 = vshrl.u32 %v445, 7
    %v447 = vsub.s32 %v428, %v446
    %v448 = vrot.slane %v415, %v447
    %v449 = vlaneseq
    %v450 = vshrl.u32 %v449, 7
    %v451 = vsub.s32 %v428, %v450
    %v452 = vrot.slane %v416, %v451
    %v453 = vlaneseq
    %v454 = vshrl.u32 %v453, 7
    %v455 = vsub.s32 %v428, %v454
    %v456 = vrot.slane %v417, %v455
    %v457 = vlaneseq
    %v458 = vshrl.u32 %v457, 7
    %v459 = vsub.s32 %v428, %v458
    %v460 = vrot.slane %v418, %v459
    %vm461 = vcmask 1041409
    %v462 = vsel %vm461, %v436, %v432
    %vm463 = vcmask 1042434
    %v464 = vsel %vm463, %v440, %v462
    %vm465 = vcmask 1043459
    %v466 = vsel %vm465, %v444, %v464
    %vm467 = vcmask 1044484
    %v468 = vsel %vm467, %v448, %v466
    %vm469 = vcmask 1045509
    %v470 = vsel %vm469, %v452, %v468
    %vm471 = vcmask 1046534
    %v472 = vsel %vm471, %v456, %v470
    %vm473 = vcmask 1047559
    %v474 = vsel %vm473, %v460, %v472
    %vm476 = vcmask 64512
    %v477 = vsel %vm476, %v474, -inf
    %478 = vmax.xlane.f32.xlu0 %v477
    %v479 = vpop.xlane.xlu0 %478
    %v481 = vlaneseq
    %v482 = vshrl.u32 %v481, 7
    %v483 = vsub.s32 0, %v482
    %v484 = vrot.slane %v479, %v483
    %v485 = vlaneseq
    %v486 = vshrl.u32 %v485, 7
    %v487 = vsub.s32 1, %v486
    %v488 = vrot.slane %v479, %v487
    %v489 = vlaneseq
    %v490 = vshrl.u32 %v489, 7
    %v491 = vsub.s32 2, %v490
    %v492 = vrot.slane %v479, %v491
    %v493 = vlaneseq
    %v494 = vshrl.u32 %v493, 7
    %v495 = vsub.s32 3, %v494
    %v496 = vrot.slane %v479, %v495
    %v497 = vlaneseq
    %v498 = vshrl.u32 %v497, 7
    %v499 = vsub.s32 4, %v498
    %v500 = vrot.slane %v479, %v499
    %v501 = vlaneseq
    %v502 = vshrl.u32 %v501, 7
    %v503 = vsub.s32 5, %v502
    %v504 = vrot.slane %v479, %v503
    %v505 = vlaneseq
    %v506 = vshrl.u32 %v505, 7
    %v507 = vsub.s32 6, %v506
    %v508 = vrot.slane %v479, %v507
    %v509 = vlaneseq
    %v510 = vshrl.u32 %v509, 7
    %v511 = vsub.s32 7, %v510
    %v512 = vrot.slane %v479, %v511
    %v521 = vsub.f32 %v411, %v484
    %v522 = vsub.f32 %v412, %v488
    %v523 = vsub.f32 %v413, %v492
    %v524 = vsub.f32 %v414, %v496
    %v525 = vsub.f32 %v415, %v500
    %v526 = vsub.f32 %v416, %v504
    %v527 = vsub.f32 %v417, %v508
    %v528 = vsub.f32 %v418, %v512
    %v529 = vmul.f32 %v521, 1.442695
    %v530 = vpow.pop %v529
    %v531 = vmul.f32 %v522, 1.442695
    %v532 = vpow.pop %v531
    %v533 = vmul.f32 %v523, 1.442695
    %v534 = vpow.pop %v533
    %v535 = vmul.f32 %v524, 1.442695
    %v536 = vpow.pop %v535
    %v537 = vmul.f32 %v525, 1.442695
    %v538 = vpow.pop %v537
    %v539 = vmul.f32 %v526, 1.442695
    %v540 = vpow.pop %v539
    %v541 = vmul.f32 %v527, 1.442695
    %v542 = vpow.pop %v541
    %v543 = vmul.f32 %v528, 1.442695
    %v544 = vpow.pop %v543
    %553 = vset.pattern.permute.xlu0 0
    %554 = vperm.xlu0 %553, %v530
    %v555 = vpop.permute.xlu0 %554
    %556 = vset.pattern.permute.xlu0 0
    %557 = vperm.xlu0 %556, %v532
    %v558 = vpop.permute.xlu0 %557
    %559 = vset.pattern.permute.xlu0 0
    %560 = vperm.xlu0 %559, %v534
    %v561 = vpop.permute.xlu0 %560
    %562 = vset.pattern.permute.xlu0 0
    %563 = vperm.xlu0 %562, %v536
    %v564 = vpop.permute.xlu0 %563
    %565 = vset.pattern.permute.xlu0 0
    %566 = vperm.xlu0 %565, %v538
    %v567 = vpop.permute.xlu0 %566
    %568 = vset.pattern.permute.xlu0 0
    %569 = vperm.xlu0 %568, %v540
    %v570 = vpop.permute.xlu0 %569
    %571 = vset.pattern.permute.xlu0 0
    %572 = vperm.xlu0 %571, %v542
    %v573 = vpop.permute.xlu0 %572
    %574 = vset.pattern.permute.xlu0 0
    %575 = vperm.xlu0 %574, %v544
    %v576 = vpop.permute.xlu0 %575
    %v577 = vlaneseq
    %v578 = vshrl.u32 %v577, 7
    %v579 = vsub.s32 %v428, %v578
    %v580 = vrot.slane %v555, %v579
    %v581 = vlaneseq
    %v582 = vshrl.u32 %v581, 7
    %v583 = vsub.s32 %v428, %v582
    %v584 = vrot.slane %v558, %v583
    %v585 = vlaneseq
    %v586 = vshrl.u32 %v585, 7
    %v587 = vsub.s32 %v428, %v586
    %v588 = vrot.slane %v561, %v587
    %v589 = vlaneseq
    %v590 = vshrl.u32 %v589, 7
    %v591 = vsub.s32 %v428, %v590
    %v592 = vrot.slane %v564, %v591
    %v593 = vlaneseq
    %v594 = vshrl.u32 %v593, 7
    %v595 = vsub.s32 %v428, %v594
    %v596 = vrot.slane %v567, %v595
    %v597 = vlaneseq
    %v598 = vshrl.u32 %v597, 7
    %v599 = vsub.s32 %v428, %v598
    %v600 = vrot.slane %v570, %v599
    %v601 = vlaneseq
    %v602 = vshrl.u32 %v601, 7
    %v603 = vsub.s32 %v428, %v602
    %v604 = vrot.slane %v573, %v603
    %v605 = vlaneseq
    %v606 = vshrl.u32 %v605, 7
    %v607 = vsub.s32 %v428, %v606
    %v608 = vrot.slane %v576, %v607
    %v609 = vsel %vm461, %v584, %v580
    %v610 = vsel %vm463, %v588, %v609
    %v611 = vsel %vm465, %v592, %v610
    %v612 = vsel %vm467, %v596, %v611
    %v613 = vsel %vm469, %v600, %v612
    %v614 = vsel %vm471, %v604, %v613
    %v615 = vsel %vm473, %v608, %v614
    %v617 = vsel %vm476, %v615, 0.0
    %618 = vadd.xlane.f32.xlu0 %v617
    %v619 = vpop.xlane.xlu0 %618
    %v620 = vrcp.pop %v619
    %v622 = vlaneseq
    %v623 = vshrl.u32 %v622, 7
    %v624 = vsub.s32 0, %v623
    %v625 = vrot.slane %v620, %v624
    %v626 = vlaneseq
    %v627 = vshrl.u32 %v626, 7
    %v628 = vsub.s32 1, %v627
    %v629 = vrot.slane %v620, %v628
    %v630 = vlaneseq
    %v631 = vshrl.u32 %v630, 7
    %v632 = vsub.s32 2, %v631
    %v633 = vrot.slane %v620, %v632
    %v634 = vlaneseq
    %v635 = vshrl.u32 %v634, 7
    %v636 = vsub.s32 3, %v635
    %v637 = vrot.slane %v620, %v636
    %v638 = vlaneseq
    %v639 = vshrl.u32 %v638, 7
    %v640 = vsub.s32 4, %v639
    %v641 = vrot.slane %v620, %v640
    %v642 = vlaneseq
    %v643 = vshrl.u32 %v642, 7
    %v644 = vsub.s32 5, %v643
    %v645 = vrot.slane %v620, %v644
    %v646 = vlaneseq
    %v647 = vshrl.u32 %v646, 7
    %v648 = vsub.s32 6, %v647
    %v649 = vrot.slane %v620, %v648
    %v650 = vlaneseq
    %v651 = vshrl.u32 %v650, 7
    %v652 = vsub.s32 7, %v651
    %v653 = vrot.slane %v620, %v652
    %v662 = vmul.f32 %v530, %v625
    %v663 = vmul.f32 %v532, %v629
    %v664 = vmul.f32 %v534, %v633
    %v665 = vmul.f32 %v536, %v637
    %v666 = vmul.f32 %v538, %v641
    %v667 = vmul.f32 %v540, %v645
    %v668 = vmul.f32 %v542, %v649
    %v669 = vmul.f32 %v544, %v653
    %671 = vset.pattern.permute.xlu0 0
    %672 = vperm.xlu0 %671, %v662
    %v673 = vpop.permute.xlu0 %672
    %676 = vset.pattern.permute.xlu0 0
    %677 = vperm.xlu0 %676, %v663
    %v678 = vpop.permute.xlu0 %677
    %681 = vset.pattern.permute.xlu0 0
    %682 = vperm.xlu0 %681, %v664
    %v683 = vpop.permute.xlu0 %682
    %686 = vset.pattern.permute.xlu0 0
    %687 = vperm.xlu0 %686, %v665
    %v688 = vpop.permute.xlu0 %687
    %691 = vset.pattern.permute.xlu0 0
    %692 = vperm.xlu0 %691, %v666
    %v693 = vpop.permute.xlu0 %692
    %696 = vset.pattern.permute.xlu0 0
    %697 = vperm.xlu0 %696, %v667
    %v698 = vpop.permute.xlu0 %697
    %701 = vset.pattern.permute.xlu0 0
    %702 = vperm.xlu0 %701, %v668
    %v703 = vpop.permute.xlu0 %702
    %706 = vset.pattern.permute.xlu0 0
    %707 = vperm.xlu0 %706, %v669
    %v708 = vpop.permute.xlu0 %707
    %v710 = vmul.f32 %v673, %v29
    %v711 = vmul.f32 %v678, %v30
    %v712 = vmul.f32 %v683, %v31
    %v713 = vmul.f32 %v688, %v32
    %v714 = vmul.f32 %v693, %v33
    %v715 = vmul.f32 %v698, %v34
    %v716 = vmul.f32 %v703, %v35
    %v717 = vmul.f32 %v708, %v36
    %v718 = vsel %vm41, %v710, 0.0
    %v719 = vrot.slane %v718, 4
    %v720 = vadd.f32 %v718, %v719
    %v721 = vrot.slane %v720, 2
    %v722 = vadd.f32 %v720, %v721
    %v723 = vrot.slane %v722, 1
    %v724 = vadd.f32 %v722, %v723
    %v725 = vsel %vm41, %v711, 0.0
    %v726 = vrot.slane %v725, 4
    %v727 = vadd.f32 %v725, %v726
    %v728 = vrot.slane %v727, 2
    %v729 = vadd.f32 %v727, %v728
    %v730 = vrot.slane %v729, 1
    %v731 = vadd.f32 %v729, %v730
    %v732 = vsel %vm41, %v712, 0.0
    %v733 = vrot.slane %v732, 4
    %v734 = vadd.f32 %v732, %v733
    %v735 = vrot.slane %v734, 2
    %v736 = vadd.f32 %v734, %v735
    %v737 = vrot.slane %v736, 1
    %v738 = vadd.f32 %v736, %v737
    %v739 = vsel %vm41, %v713, 0.0
    %v740 = vrot.slane %v739, 4
    %v741 = vadd.f32 %v739, %v740
    %v742 = vrot.slane %v741, 2
    %v743 = vadd.f32 %v741, %v742
    %v744 = vrot.slane %v743, 1
    %v745 = vadd.f32 %v743, %v744
    %v746 = vsel %vm41, %v714, 0.0
    %v747 = vrot.slane %v746, 4
    %v748 = vadd.f32 %v746, %v747
    %v749 = vrot.slane %v748, 2
    %v750 = vadd.f32 %v748, %v749
    %v751 = vrot.slane %v750, 1
    %v752 = vadd.f32 %v750, %v751
    %v753 = vsel %vm41, %v715, 0.0
    %v754 = vrot.slane %v753, 4
    %v755 = vadd.f32 %v753, %v754
    %v756 = vrot.slane %v755, 2
    %v757 = vadd.f32 %v755, %v756
    %v758 = vrot.slane %v757, 1
    %v759 = vadd.f32 %v757, %v758
    %v760 = vsel %vm41, %v716, 0.0
    %v761 = vrot.slane %v760, 4
    %v762 = vadd.f32 %v760, %v761
    %v763 = vrot.slane %v762, 2
    %v764 = vadd.f32 %v762, %v763
    %v765 = vrot.slane %v764, 1
    %v766 = vadd.f32 %v764, %v765
    %v767 = vsel %vm41, %v717, 0.0
    %v768 = vrot.slane %v767, 4
    %v769 = vadd.f32 %v767, %v768
    %v770 = vrot.slane %v769, 2
    %v771 = vadd.f32 %v769, %v770
    %v772 = vrot.slane %v771, 1
    %v773 = vadd.f32 %v771, %v772
    %v782 = vsel %vm461, %v731, %v724
    %v783 = vsel %vm463, %v738, %v782
    %v784 = vsel %vm465, %v745, %v783
    %v785 = vsel %vm467, %v752, %v784
    %v786 = vsel %vm469, %v759, %v785
    %v787 = vsel %vm471, %v766, %v786
    %v788 = vsel %vm473, %v773, %v787
    %v790 = vadd.s32 %v428, 4294967264
    %v791 = vlaneseq
    %v792 = vshrl.u32 %v791, 7
    %v793 = vsub.s32 %v790, %v792
    %v794 = vrot.slane %v673, %v793
    %v795 = vlaneseq
    %v796 = vshrl.u32 %v795, 7
    %v797 = vsub.s32 %v790, %v796
    %v798 = vrot.slane %v678, %v797
    %v799 = vlaneseq
    %v800 = vshrl.u32 %v799, 7
    %v801 = vsub.s32 %v790, %v800
    %v802 = vrot.slane %v683, %v801
    %v803 = vlaneseq
    %v804 = vshrl.u32 %v803, 7
    %v805 = vsub.s32 %v790, %v804
    %v806 = vrot.slane %v688, %v805
    %v807 = vlaneseq
    %v808 = vshrl.u32 %v807, 7
    %v809 = vsub.s32 %v790, %v808
    %v810 = vrot.slane %v693, %v809
    %v811 = vlaneseq
    %v812 = vshrl.u32 %v811, 7
    %v813 = vsub.s32 %v790, %v812
    %v814 = vrot.slane %v698, %v813
    %v815 = vlaneseq
    %v816 = vshrl.u32 %v815, 7
    %v817 = vsub.s32 %v790, %v816
    %v818 = vrot.slane %v703, %v817
    %v819 = vlaneseq
    %v820 = vshrl.u32 %v819, 7
    %v821 = vsub.s32 %v790, %v820
    %v822 = vrot.slane %v708, %v821
    %v823 = vsel %vm461, %v798, %v794
    %v824 = vsel %vm463, %v802, %v823
    %v825 = vsel %vm465, %v806, %v824
    %v826 = vsel %vm467, %v810, %v825
    %v827 = vsel %vm469, %v814, %v826
    %v828 = vsel %vm471, %v818, %v827
    %v829 = vsel %vm473, %v822, %v828
    %v831 = vsel %vm41, %v788, %v829
    %vm832 = vcmask 326656
    %v833 = vsel %vm832, %v831, 0.0
    %834 = vst [vmem:[#allocation3] sm:$0xff] %v833
    // Predicated region
    $region30: #{tpu_custom_call.1} parent=1 // pred_check
      _
    $region31: #{tpu_custom_call.1} parent=1 // pred_check_branch
      %836 = sbr.rel (0) target = $region33
    $region32: #{tpu_custom_call.1} parent=1 // pred_region
      %s838 = ssub.s32 128, 128
      %839 = vsyncadd [#allocation4], %s838
      %s841 = sshll.u32 [#allocation3], 4
      %s842 = int_to_ptr.vmem [resolvable:$true] %s841
      %844 = dma.vmem_to_hbm [thread:$0]  %s842, 128, %s7, [#allocation4]
    $region33: #{tpu_custom_call.1} parent=1 // pred_fallthru
      _
    // Predicated region
    $region34: #{tpu_custom_call.1} parent=1 // pred_check
      _
    $region35: #{tpu_custom_call.1} parent=1 // pred_check_branch
      %846 = sbr.rel (0) target = $region37
    $region36: #{tpu_custom_call.1} parent=1 // pred_region
      %847 = dma.done [#allocation4], 128
    $region37: #{tpu_custom_call.1} parent=1 // pred_fallthru
      _
    %848 = vsyncpa [#allocation4], 1

</llo_original>
